<compile_context>
chip_gen: v7x
topology: tpu7x:2x2x1
jax: 0.10.0
libtpu: 0.0.40
codegen_flags: <defaults>
</compile_context>

<pallas_src>
import numpy as np
import jax
import jax.numpy as jnp
from jax import lax
from jax.experimental import pallas as pl
from jax.experimental.pallas import tpu as pltpu

# ---- static model configuration (small but consistent with AudioRNN forward) ----
B = 2              # batch
CIN = 1            # input_size (mono audio)
L = 576            # input length
K = 80             # conv kernel size
STRIDE = 16        # conv stride
LC = (L - K) // STRIDE + 1     # 32 = conv output length
POOL = 4
LP = LC // POOL                # 8  = RNN sequence length
H = 32             # hidden_dim
NL = 2             # n_layers
OUT = 10           # output_size
LANES = 128        # lane-dense width used for every in-kernel tensor
KPAD = 128         # lane-aligned contraction dim for the conv matmul
EPS = 1e-5


def audio_rnn_kernel(patches_ref, convw_ref, wslab_ref, bslab_ref, out_ref):
    f32 = jnp.float32
    bf16 = jnp.bfloat16

    # ---- unpack packed parameter slabs (static, aligned, lane-dense slices) ----
    bias = bslab_ref[...]                          # (5, 128) f32
    conv_b = bias[0:1, :]                          # conv bias   (lanes >= H are 0)
    gamma = bias[1:2, :]                           # BN weight   (lanes >= H are 0)
    beta = bias[2:3, :]                            # BN bias
    rnn_b = bias[3:4, :]                           # [b_ih0+b_hh0 | b_ih1+b_hh1 | 0]
    fc_b = bias[4:5, :]                            # fc bias     (lanes >= OUT are 0)

    proj_rhs = wslab_ref[0 * LANES:1 * LANES, :]   # rows 0:H, cols 0:H  = w_ih0
    rec_rhs = wslab_ref[1 * LANES:2 * LANES, :]    # [[w_hh0, w_ih1],[0, w_hh1]] block
    fc_rhs = wslab_ref[2 * LANES:3 * LANES, :]     # rows H:2H, cols 0:OUT = fc_w

    # ---- Conv1d(CIN->H, k=80, stride=16): one bf16 MXU matmul, f32 accumulate.
    #      Output is 128 lanes wide; real channels live in lanes [0, H). ----
    conv = jnp.dot(patches_ref[...], convw_ref[...],
                   preferred_element_type=f32) + conv_b             # (LP*B*POOL, 128)

    # ---- BatchNorm1d (batch statistics over all B*LC positions) + ReLU.
    #      Padded lanes stay exactly 0 (0 * rsqrt(0+eps) * gamma(0) + beta(0)). ----
    inv_n = 1.0 / (B * LC)
    mean = jnp.sum(conv, axis=0, keepdims=True) * inv_n
    meansq = jnp.sum(conv * conv, axis=0, keepdims=True) * inv_n
    var = meansq - mean * mean                                      # biased variance
    act = jnp.maximum(gamma * ((conv - mean) * lax.rsqrt(var + EPS)) + beta, 0.0)

    # ---- MaxPool1d(4): rows are ordered (s*B + b)*POOL + j, so each group of 4 rows
    #      is one (time-step, batch) pair; result is time-major (row = s*B + b). ----
    pooled = jnp.max(act.reshape(LP * B, POOL, LANES), axis=1)      # (LP*B, 128)

    # ---- Hoisted layer-0 input projection for ALL steps, biases folded in:
    #      block s: lanes [0,H) = pooled_s @ w_ih0 + b0, lanes [H,2H) = b1, rest 0. ----
    xproj = jnp.dot(pooled.astype(bf16), proj_rhs,
                    preferred_element_type=f32) + rnn_b             # (LP*B, 128)

    # ---- Fused 2-layer tanh RNN (h0-states zero-initialised).
    #      State lanes: [h0(t) | h1(t-1) | 0].  Per step: ONE matmul + ONE tanh.
    lane = lax.broadcasted_iota(jnp.int32, (B, LANES), 1)
    state = jnp.where(lane < H, jnp.tanh(xproj[0:B, :]), 0.0)       # [tanh(xproj0) | 0]
    m = jnp.full((B, LANES), -1.0, f32)                             # tanh(x) > -1 always
    for t in range(LP):
        z = jnp.dot(state.astype(bf16), rec_rhs, preferred_element_type=f32)
        # Last step: the new h0 half is never consumed (fc_rhs zeroes those rows),
        # so any projection block supplies the constant b1 in its right half.
        nb = t + 1 if t + 1 < LP else 0
        state = jnp.tanh(z + xproj[nb * B:(nb + 1) * B, :])          # [h0(t+1) | h1(t)]
        m = jnp.maximum(m, state)
        # TODO(synk): dropout(p=0.1) between RNN layers: identity (eval semantics).

    # ---- Linear head. fc_rhs has zeros in rows [0,H) and [2H,128), so only the h1
    #      (max-over-time) lanes of m reach the output. Store the full 128-lane tile.
    out_ref[...] = jnp.dot(m.astype(bf16), fc_rhs, preferred_element_type=f32) + fc_b


def im2col(x):
    """x: (B, CIN, L) -> bf16 patches (LP*B*POOL, KPAD), row = (s*B + b)*POOL + j
    where the conv time index is t = s*POOL + j. Contraction dim zero-padded to 128."""
    idx = jnp.arange(LC)[:, None] * STRIDE + jnp.arange(K)[None, :]   # (LC, K)
    p = x[:, :, idx]                                                  # (B, CIN, LC, K)
    p = p.reshape(B, CIN, LP, POOL, K)
    p = jnp.transpose(p, (2, 0, 3, 1, 4)).reshape(LP * B * POOL, CIN * K)
    p = jnp.pad(p, ((0, 0), (0, KPAD - CIN * K)))
    return p.astype(jnp.bfloat16)


def pack_params(p):
    """Pack the 11 parameter tensors into 3 lane-dense kernel buffers.
    Called ONCE at parameter creation (hoisted out of the per-call jit)."""
    conv_w2d = p["conv_w"].reshape(H, CIN * K)                        # (H, CIN*K)
    convw = (jnp.zeros((KPAD, LANES), jnp.float32)
             .at[:CIN * K, :H].set(conv_w2d.T)).astype(jnp.bfloat16)  # (128,128) bf16

    proj_rhs = jnp.zeros((LANES, LANES), jnp.float32).at[:H, :H].set(p["w_ih"][0])
    rec_rhs = (jnp.zeros((LANES, LANES), jnp.float32)
               .at[:H, :H].set(p["w_hh"][0])
               .at[:H, H:2 * H].set(p["w_ih"][1])
               .at[H:2 * H, H:2 * H].set(p["w_hh"][1]))
    fc_rhs = jnp.zeros((LANES, LANES), jnp.float32).at[H:2 * H, :OUT].set(p["fc_w"])
    wslab = jnp.concatenate([proj_rhs, rec_rhs, fc_rhs],
                            axis=0).astype(jnp.bfloat16)              # (384,128) bf16

    def pad_lanes(v):
        return jnp.zeros((LANES,), jnp.float32).at[:v.shape[0]].set(v)

    rnn_b = (jnp.zeros((LANES,), jnp.float32)
             .at[:H].set(p["b_ih"][0] + p["b_hh"][0])
             .at[H:2 * H].set(p["b_ih"][1] + p["b_hh"][1]))
    bslab = jnp.stack([pad_lanes(p["conv_b"]), pad_lanes(p["gamma"]),
                       pad_lanes(p["beta"]), rnn_b, pad_lanes(p["fc_b"])],
                      axis=0)                                          # (5,128) f32
    return convw, wslab, bslab


def init_params(key):
    ks = jax.random.split(key, 8)
    s_conv = 1.0 / np.sqrt(CIN * K)
    s_rnn = 1.0 / np.sqrt(H)
    # RNN / FC weights stored pre-transposed as (in, out) so kernels do x @ W.
    return dict(
        conv_w=jax.random.uniform(ks[0], (H, CIN, K), jnp.float32, -s_conv, s_conv),
        conv_b=jax.random.uniform(ks[1], (H,), jnp.float32, -s_conv, s_conv),
        gamma=jnp.ones((H,), jnp.float32),      # PyTorch BN default init
        beta=jnp.zeros((H,), jnp.float32),
        w_ih=jax.random.uniform(ks[2], (NL, H, H), jnp.float32, -s_rnn, s_rnn),
        w_hh=jax.random.uniform(ks[3], (NL, H, H), jnp.float32, -s_rnn, s_rnn),
        b_ih=jax.random.uniform(ks[4], (NL, H), jnp.float32, -s_rnn, s_rnn),
        b_hh=jax.random.uniform(ks[5], (NL, H), jnp.float32, -s_rnn, s_rnn),
        fc_w=jax.random.uniform(ks[6], (H, OUT), jnp.float32, -s_rnn, s_rnn),
        fc_b=jax.random.uniform(ks[7], (OUT,), jnp.float32, -s_rnn, s_rnn),
    )


@jax.jit
def audio_rnn_forward(x, convw, wslab, bslab):
    patches = im2col(x)
    vmem = pl.BlockSpec(memory_space=pltpu.MemorySpace.VMEM)
    # Whole-array VMEM specs, single grid point: total footprint < 0.2 MiB, so
    # tiling / grids / pipelining would only add overhead on v5e/v6e/v7x.
    out = pl.pallas_call(
        audio_rnn_kernel,
        out_shape=jax.ShapeDtypeStruct((B, LANES), jnp.float32),
        in_specs=[vmem] * 4,
        out_specs=vmem,
    )(patches, convw, wslab, bslab)
    return out[:, :OUT]          # lane-dense store in-kernel; cheap slice here


def reference_forward(x, p):
    # Pure-JAX f32 reference mirroring the PyTorch forward (eval dropout, batch-stat BN).
    idx = jnp.arange(LC)[:, None] * STRIDE + jnp.arange(K)[None, :]
    patches = jnp.transpose(x[:, :, idx], (0, 2, 1, 3)).reshape(B, LC, CIN * K)
    conv = patches @ p["conv_w"].reshape(H, CIN * K).T + p["conv_b"]      # (B, LC, H)
    mean = conv.mean(axis=(0, 1), keepdims=True)
    var = ((conv - mean) ** 2).mean(axis=(0, 1), keepdims=True)
    act = jnp.maximum(p["gamma"] * (conv - mean) / jnp.sqrt(var + EPS) + p["beta"], 0.0)
    pooled = act.reshape(B, LP, POOL, H).max(axis=2)                      # (B, LP, H)
    h = [jnp.zeros((B, H), jnp.float32) for _ in range(NL)]
    m = jnp.full((B, H), -jnp.inf, jnp.float32)
    for t in range(LP):
        inp = pooled[:, t, :]
        for l in range(NL):
            h[l] = jnp.tanh(inp @ p["w_ih"][l] + p["b_ih"][l]
                            + h[l] @ p["w_hh"][l] + p["b_hh"][l])
            inp = h[l]
        m = jnp.maximum(m, inp)
    return m @ p["fc_w"] + p["fc_b"]


if __name__ == "__main__":
    key = jax.random.PRNGKey(0)
    pkey, xkey = jax.random.split(key)
    params = init_params(pkey)
    x = jax.random.normal(xkey, (B, CIN, L), jnp.float32)

    # Parameters are constant across forward calls: pack the slabs exactly once.
    convw, wslab, bslab = pack_params(params)

    out = jax.block_until_ready(audio_rnn_forward(x, convw, wslab, bslab))
    ref = reference_forward(x, params)
    if out.shape != (B, OUT):
        raise AssertionError(f"bad output shape {out.shape}")
    # bf16 matmul operands (conv, RNN, FC) vs the f32 reference -> slightly looser
    # tolerance than a pure-f32 kernel would need.
    if not np.allclose(np.asarray(out), np.asarray(ref), atol=3e-2, rtol=3e-2):
        raise AssertionError("Pallas output mismatch vs JAX reference")
    print("KERNEL_OK")
</pallas_src>

<mosaic_0001>
module attributes {stable_mosaic.version = 11 : i64} {
  func.func @audio_rnn_kernel(%arg0: memref<64x128xbf16, #tpu.memory_space<vmem>>, %arg1: memref<128x128xbf16, #tpu.memory_space<vmem>>, %arg2: memref<384x128xbf16, #tpu.memory_space<vmem>>, %arg3: memref<5x128xf32, #tpu.memory_space<vmem>>, %arg4: memref<2x128xf32, #tpu.memory_space<vmem>>) attributes {dimension_semantics = [], scalar_prefetch = 0 : i64, scratch_operands = 0 : i64, tpu.core_type = #tpu.core_type<tc>} {
    %c0 = arith.constant 0 : index
    %c0_0 = arith.constant 0 : index
    %0 = vector.load %arg3[%c0, %c0_0] : memref<5x128xf32, #tpu.memory_space<vmem>>, vector<5x128xf32>
    %1 = vector.extract_strided_slice %0 {offsets = [0, 0], sizes = [1, 128], strides = [1, 1]} : vector<5x128xf32> to vector<1x128xf32>
    %2 = vector.extract_strided_slice %0 {offsets = [1, 0], sizes = [1, 128], strides = [1, 1]} : vector<5x128xf32> to vector<1x128xf32>
    %3 = vector.extract_strided_slice %0 {offsets = [2, 0], sizes = [1, 128], strides = [1, 1]} : vector<5x128xf32> to vector<1x128xf32>
    %4 = vector.extract_strided_slice %0 {offsets = [3, 0], sizes = [1, 128], strides = [1, 1]} : vector<5x128xf32> to vector<1x128xf32>
    %5 = vector.extract_strided_slice %0 {offsets = [4, 0], sizes = [1, 128], strides = [1, 1]} : vector<5x128xf32> to vector<1x128xf32>
    %c0_1 = arith.constant 0 : index
    %c0_2 = arith.constant 0 : index
    %6 = vector.load %arg2[%c0_1, %c0_2] : memref<384x128xbf16, #tpu.memory_space<vmem>>, vector<128x128xbf16>
    %c128 = arith.constant 128 : index
    %c0_3 = arith.constant 0 : index
    %7 = vector.load %arg2[%c128, %c0_3] : memref<384x128xbf16, #tpu.memory_space<vmem>>, vector<128x128xbf16>
    %c256 = arith.constant 256 : index
    %c0_4 = arith.constant 0 : index
    %8 = vector.load %arg2[%c256, %c0_4] : memref<384x128xbf16, #tpu.memory_space<vmem>>, vector<128x128xbf16>
    %c0_5 = arith.constant 0 : index
    %c0_6 = arith.constant 0 : index
    %9 = vector.load %arg0[%c0_5, %c0_6] : memref<64x128xbf16, #tpu.memory_space<vmem>>, vector<64x128xbf16>
    %c0_7 = arith.constant 0 : index
    %c0_8 = arith.constant 0 : index
    %10 = vector.load %arg1[%c0_7, %c0_8] : memref<128x128xbf16, #tpu.memory_space<vmem>>, vector<128x128xbf16>
    %cst = arith.constant dense<0.000000e+00> : vector<64x128xf32>
    %11 = tpu.matmul %9, %10, %cst {dimension_numbers = #tpu.dot_dimension_numbers<[1], [0], [0], [1], [0, 0, 1, 1], [], []>} : vector<64x128xbf16>, vector<128x128xbf16>, vector<64x128xf32> -> vector<64x128xf32>
    %12 = vector.broadcast %1 : vector<1x128xf32> to vector<64x128xf32>
    %13 = arith.addf %11, %12 : vector<64x128xf32>
    %cst_9 = arith.constant dense<0.000000e+00> : vector<128xf32>
    %14 = vector.multi_reduction <add>, %13, %cst_9 [0] : vector<64x128xf32> to vector<128xf32>
    %15 = vector.shape_cast %14 : vector<128xf32> to vector<1x128xf32>
    %cst_10 = arith.constant 1.562500e-02 : f32
    %16 = vector.broadcast %cst_10 : f32 to vector<1x128xf32>
    %17 = arith.mulf %15, %16 : vector<1x128xf32>
    %18 = arith.mulf %13, %13 : vector<64x128xf32>
    %cst_11 = arith.constant dense<0.000000e+00> : vector<128xf32>
    %19 = vector.multi_reduction <add>, %18, %cst_11 [0] : vector<64x128xf32> to vector<128xf32>
    %20 = vector.shape_cast %19 : vector<128xf32> to vector<1x128xf32>
    %cst_12 = arith.constant 1.562500e-02 : f32
    %21 = vector.broadcast %cst_12 : f32 to vector<1x128xf32>
    %22 = arith.mulf %20, %21 : vector<1x128xf32>
    %23 = arith.mulf %17, %17 : vector<1x128xf32>
    %24 = arith.subf %22, %23 : vector<1x128xf32>
    %25 = vector.broadcast %17 : vector<1x128xf32> to vector<64x128xf32>
    %26 = arith.subf %13, %25 : vector<64x128xf32>
    %cst_13 = arith.constant 9.99999974E-6 : f32
    %27 = vector.broadcast %cst_13 : f32 to vector<1x128xf32>
    %28 = arith.addf %24, %27 : vector<1x128xf32>
    %29 = math.rsqrt %28 : vector<1x128xf32>
    %30 = vector.broadcast %29 : vector<1x128xf32> to vector<64x128xf32>
    %31 = arith.mulf %26, %30 : vector<64x128xf32>
    %32 = vector.broadcast %2 : vector<1x128xf32> to vector<64x128xf32>
    %33 = arith.mulf %32, %31 : vector<64x128xf32>
    %34 = vector.broadcast %3 : vector<1x128xf32> to vector<64x128xf32>
    %35 = arith.addf %33, %34 : vector<64x128xf32>
    %cst_14 = arith.constant 0.000000e+00 : f32
    %36 = vector.broadcast %cst_14 : f32 to vector<64x128xf32>
    %37 = arith.maximumf %35, %36 : vector<64x128xf32>
    %38 = vector.shape_cast %37 : vector<64x128xf32> to vector<16x4x128xf32>
    %cst_15 = arith.constant dense<0xFF800000> : vector<16x128xf32>
    %39 = vector.multi_reduction <maximumf>, %38, %cst_15 [1] : vector<16x4x128xf32> to vector<16x128xf32>
    %40 = arith.truncf %39 : vector<16x128xf32> to vector<16x128xbf16>
    %cst_16 = arith.constant dense<0.000000e+00> : vector<16x128xf32>
    %41 = tpu.matmul %40, %6, %cst_16 {dimension_numbers = #tpu.dot_dimension_numbers<[1], [0], [0], [1], [0, 0, 1, 1], [], []>} : vector<16x128xbf16>, vector<128x128xbf16>, vector<16x128xf32> -> vector<16x128xf32>
    %42 = vector.broadcast %4 : vector<1x128xf32> to vector<16x128xf32>
    %43 = arith.addf %41, %42 : vector<16x128xf32>
    %44 = tpu.iota {dimensions = array<i32: 1>} : vector<2x128xi32>
    %c32_i32 = arith.constant 32 : i32
    %45 = vector.broadcast %c32_i32 : i32 to vector<2x128xi32>
    %46 = arith.cmpi slt, %44, %45 : vector<2x128xi32>
    %47 = vector.extract_strided_slice %43 {offsets = [0, 0], sizes = [2, 128], strides = [1, 1]} : vector<16x128xf32> to vector<2x128xf32>
    %48 = math.tanh %47 : vector<2x128xf32>
    %cst_17 = arith.constant 0.000000e+00 : f32
    %49 = vector.broadcast %cst_17 : f32 to vector<2x128xf32>
    %50 = arith.select %46, %48, %49 : vector<2x128xi1>, vector<2x128xf32>
    %cst_18 = arith.constant -1.000000e+00 : f32
    %51 = vector.broadcast %cst_18 : f32 to vector<2x128xf32>
    %52 = arith.truncf %50 : vector<2x128xf32> to vector<2x128xbf16>
    %cst_19 = arith.constant dense<0.000000e+00> : vector<2x128xf32>
    %53 = tpu.matmul %52, %7, %cst_19 {dimension_numbers = #tpu.dot_dimension_numbers<[1], [0], [0], [1], [0, 0, 1, 1], [], []>} : vector<2x128xbf16>, vector<128x128xbf16>, vector<2x128xf32> -> vector<2x128xf32>
    %54 = vector.extract_strided_slice %43 {offsets = [2, 0], sizes = [2, 128], strides = [1, 1]} : vector<16x128xf32> to vector<2x128xf32>
    %55 = arith.addf %53, %54 : vector<2x128xf32>
    %56 = math.tanh %55 : vector<2x128xf32>
    %57 = arith.maximumf %51, %56 : vector<2x128xf32>
    %58 = arith.truncf %56 : vector<2x128xf32> to vector<2x128xbf16>
    %cst_20 = arith.constant dense<0.000000e+00> : vector<2x128xf32>
    %59 = tpu.matmul %58, %7, %cst_20 {dimension_numbers = #tpu.dot_dimension_numbers<[1], [0], [0], [1], [0, 0, 1, 1], [], []>} : vector<2x128xbf16>, vector<128x128xbf16>, vector<2x128xf32> -> vector<2x128xf32>
    %60 = vector.extract_strided_slice %43 {offsets = [4, 0], sizes = [2, 128], strides = [1, 1]} : vector<16x128xf32> to vector<2x128xf32>
    %61 = arith.addf %59, %60 : vector<2x128xf32>
    %62 = math.tanh %61 : vector<2x128xf32>
    %63 = arith.maximumf %57, %62 : vector<2x128xf32>
    %64 = arith.truncf %62 : vector<2x128xf32> to vector<2x128xbf16>
    %cst_21 = arith.constant dense<0.000000e+00> : vector<2x128xf32>
    %65 = tpu.matmul %64, %7, %cst_21 {dimension_numbers = #tpu.dot_dimension_numbers<[1], [0], [0], [1], [0, 0, 1, 1], [], []>} : vector<2x128xbf16>, vector<128x128xbf16>, vector<2x128xf32> -> vector<2x128xf32>
    %66 = vector.extract_strided_slice %43 {offsets = [6, 0], sizes = [2, 128], strides = [1, 1]} : vector<16x128xf32> to vector<2x128xf32>
    %67 = arith.addf %65, %66 : vector<2x128xf32>
    %68 = math.tanh %67 : vector<2x128xf32>
    %69 = arith.maximumf %63, %68 : vector<2x128xf32>
    %70 = arith.truncf %68 : vector<2x128xf32> to vector<2x128xbf16>
    %cst_22 = arith.constant dense<0.000000e+00> : vector<2x128xf32>
    %71 = tpu.matmul %70, %7, %cst_22 {dimension_numbers = #tpu.dot_dimension_numbers<[1], [0], [0], [1], [0, 0, 1, 1], [], []>} : vector<2x128xbf16>, vector<128x128xbf16>, vector<2x128xf32> -> vector<2x128xf32>
    %72 = vector.extract_strided_slice %43 {offsets = [8, 0], sizes = [2, 128], strides = [1, 1]} : vector<16x128xf32> to vector<2x128xf32>
    %73 = arith.addf %71, %72 : vector<2x128xf32>
    %74 = math.tanh %73 : vector<2x128xf32>
    %75 = arith.maximumf %69, %74 : vector<2x128xf32>
    %76 = arith.truncf %74 : vector<2x128xf32> to vector<2x128xbf16>
    %cst_23 = arith.constant dense<0.000000e+00> : vector<2x128xf32>
    %77 = tpu.matmul %76, %7, %cst_23 {dimension_numbers = #tpu.dot_dimension_numbers<[1], [0], [0], [1], [0, 0, 1, 1], [], []>} : vector<2x128xbf16>, vector<128x128xbf16>, vector<2x128xf32> -> vector<2x128xf32>
    %78 = vector.extract_strided_slice %43 {offsets = [10, 0], sizes = [2, 128], strides = [1, 1]} : vector<16x128xf32> to vector<2x128xf32>
    %79 = arith.addf %77, %78 : vector<2x128xf32>
    %80 = math.tanh %79 : vector<2x128xf32>
    %81 = arith.maximumf %75, %80 : vector<2x128xf32>
    %82 = arith.truncf %80 : vector<2x128xf32> to vector<2x128xbf16>
    %cst_24 = arith.constant dense<0.000000e+00> : vector<2x128xf32>
    %83 = tpu.matmul %82, %7, %cst_24 {dimension_numbers = #tpu.dot_dimension_numbers<[1], [0], [0], [1], [0, 0, 1, 1], [], []>} : vector<2x128xbf16>, vector<128x128xbf16>, vector<2x128xf32> -> vector<2x128xf32>
    %84 = vector.extract_strided_slice %43 {offsets = [12, 0], sizes = [2, 128], strides = [1, 1]} : vector<16x128xf32> to vector<2x128xf32>
    %85 = arith.addf %83, %84 : vector<2x128xf32>
    %86 = math.tanh %85 : vector<2x128xf32>
    %87 = arith.maximumf %81, %86 : vector<2x128xf32>
    %88 = arith.truncf %86 : vector<2x128xf32> to vector<2x128xbf16>
    %cst_25 = arith.constant dense<0.000000e+00> : vector<2x128xf32>
    %89 = tpu.matmul %88, %7, %cst_25 {dimension_numbers = #tpu.dot_dimension_numbers<[1], [0], [0], [1], [0, 0, 1, 1], [], []>} : vector<2x128xbf16>, vector<128x128xbf16>, vector<2x128xf32> -> vector<2x128xf32>
    %90 = vector.extract_strided_slice %43 {offsets = [14, 0], sizes = [2, 128], strides = [1, 1]} : vector<16x128xf32> to vector<2x128xf32>
    %91 = arith.addf %89, %90 : vector<2x128xf32>
    %92 = math.tanh %91 : vector<2x128xf32>
    %93 = arith.maximumf %87, %92 : vector<2x128xf32>
    %94 = arith.truncf %92 : vector<2x128xf32> to vector<2x128xbf16>
    %cst_26 = arith.constant dense<0.000000e+00> : vector<2x128xf32>
    %95 = tpu.matmul %94, %7, %cst_26 {dimension_numbers = #tpu.dot_dimension_numbers<[1], [0], [0], [1], [0, 0, 1, 1], [], []>} : vector<2x128xbf16>, vector<128x128xbf16>, vector<2x128xf32> -> vector<2x128xf32>
    %96 = vector.extract_strided_slice %43 {offsets = [0, 0], sizes = [2, 128], strides = [1, 1]} : vector<16x128xf32> to vector<2x128xf32>
    %97 = arith.addf %95, %96 : vector<2x128xf32>
    %98 = math.tanh %97 : vector<2x128xf32>
    %99 = arith.maximumf %93, %98 : vector<2x128xf32>
    %100 = arith.truncf %99 : vector<2x128xf32> to vector<2x128xbf16>
    %cst_27 = arith.constant dense<0.000000e+00> : vector<2x128xf32>
    %101 = tpu.matmul %100, %8, %cst_27 {dimension_numbers = #tpu.dot_dimension_numbers<[1], [0], [0], [1], [0, 0, 1, 1], [], []>} : vector<2x128xbf16>, vector<128x128xbf16>, vector<2x128xf32> -> vector<2x128xf32>
    %102 = vector.broadcast %5 : vector<1x128xf32> to vector<2x128xf32>
    %103 = arith.addf %101, %102 : vector<2x128xf32>
    %c0_28 = arith.constant 0 : index
    %c0_29 = arith.constant 0 : index
    %104 = vector.load %arg4[%c0_28, %c0_29] : memref<2x128xf32, #tpu.memory_space<vmem>>, vector<2x128xf32>
    tpu.vector_store %arg4[%c0_28, %c0_29], %103 {strides = array<i32>} : memref<2x128xf32, #tpu.memory_space<vmem>>, vector<2x128xf32>,
    return
  }
}

</mosaic_0001>

<llo_original>
// kernel: audio_rnn_forward.1
$region0: #{audio_rnn_forward.1}
  #allocation0 [shape = 'u32[]', space=smem, size = 0x4, offset = 0x4, fixed_abs, tag = 'smem constant byte address 0x4 - core index']
  #allocation1 [shape = 'u32[144,128]{1,0:T(1,128)}', space=vmem, size = 0x12000, scoped, tag = 'internal scratch']
  %s0 = inlined_call_operand.vmem [shape: bf16[64,128], index: 0, kind: input, shape index: {}]
  %s1 = inlined_call_operand.vmem [shape: bf16[128,128], index: 1, kind: input, shape index: {}]
  %s2 = inlined_call_operand.vmem [shape: bf16[384,128], index: 2, kind: input, shape index: {}]
  %s3 = inlined_call_operand.vmem [shape: f32[5,128], index: 3, kind: input, shape index: {}]
  %s4 = inlined_call_operand.hbm [shape: f32[2,128], index: 4, kind: output, shape index: {}]
  %s5 = sld [smem:[#allocation0]]
  $region26: #{audio_rnn_forward.1} parent=0
    _
  %s7 = ssub.s32 1, %s5
  %s8 = scalar_select 0, %s7, %s5
  $region1: #{audio_rnn_forward.1} parent=0
    #allocation2 [shape = 'u8[1024]{0}', space=vmem, size = 0x400, scoped, tag = 'output window, operand 0, single buffered']
    #allocation3 [shape = 's32[1]{0}', space=sflag, size = 0x4, scoped, tag = 'scoped memory for audio_rnn_forward.1']
    %9 = vsyncpa [#allocation3], 0
    // Predicated region
    $region2: #{audio_rnn_forward.1} parent=1 // pred_check
      _
    $region3: #{audio_rnn_forward.1} parent=1 // pred_check_branch
      %11 = sbr.rel (0) target = $region5
    $region4: #{audio_rnn_forward.1} parent=1 // pred_region
      _
    $region5: #{audio_rnn_forward.1} parent=1 // pred_fallthru
      _
    // Predicated region
    $region6: #{audio_rnn_forward.1} parent=1 // pred_check
      _
    $region7: #{audio_rnn_forward.1} parent=1 // pred_check_branch
      %13 = sbr.rel (0) target = $region9
    $region8: #{audio_rnn_forward.1} parent=1 // pred_region
      _
    $region9: #{audio_rnn_forward.1} parent=1 // pred_fallthru
      _
    // Predicated region
    $region10: #{audio_rnn_forward.1} parent=1 // pred_check
      _
    $region11: #{audio_rnn_forward.1} parent=1 // pred_check_branch
      %15 = sbr.rel (0) target = $region13
    $region12: #{audio_rnn_forward.1} parent=1 // pred_region
      _
    $region13: #{audio_rnn_forward.1} parent=1 // pred_fallthru
      _
    // Predicated region
    $region14: #{audio_rnn_forward.1} parent=1 // pred_check
      _
    $region15: #{audio_rnn_forward.1} parent=1 // pred_check_branch
      %17 = sbr.rel (0) target = $region17
    $region16: #{audio_rnn_forward.1} parent=1 // pred_region
      _
    $region17: #{audio_rnn_forward.1} parent=1 // pred_fallthru
      _
    %v19 = vld [vmem:[%s3] sm:$0x1f]
    %v20 = vld [vmem:[%s2] sm:$0xf]
    %v21 = vld [vmem:[%s2 + $0x4] sm:$0xf]
    %v22 = vld [vmem:[%s2 + $0x8] sm:$0xf]
    %v23 = vld [vmem:[%s2 + $0xc] sm:$0xf]
    %v24 = vld [vmem:[%s2 + $0x10] sm:$0xf]
    %v25 = vld [vmem:[%s2 + $0x14] sm:$0xf]
    %v26 = vld [vmem:[%s2 + $0x18] sm:$0xf]
    %v27 = vld [vmem:[%s2 + $0x1c] sm:$0xf]
    %v28 = vld [vmem:[%s2 + $0x20] sm:$0xf]
    %v29 = vld [vmem:[%s2 + $0x24] sm:$0xf]
    %v30 = vld [vmem:[%s2 + $0x28] sm:$0xf]
    %v31 = vld [vmem:[%s2 + $0x2c] sm:$0xf]
    %v32 = vld [vmem:[%s2 + $0x30] sm:$0xf]
    %v33 = vld [vmem:[%s2 + $0x34] sm:$0xf]
    %v34 = vld [vmem:[%s2 + $0x38] sm:$0xf]
    %v35 = vld [vmem:[%s2 + $0x3c] sm:$0xf]
    %v36 = vld [vmem:[%s2 + $0x40] sm:$0xf]
    %v37 = vld [vmem:[%s2 + $0x44] sm:$0xf]
    %v38 = vld [vmem:[%s2 + $0x48] sm:$0xf]
    %v39 = vld [vmem:[%s2 + $0x4c] sm:$0xf]
    %v40 = vld [vmem:[%s2 + $0x50] sm:$0xf]
    %v41 = vld [vmem:[%s2 + $0x54] sm:$0xf]
    %v42 = vld [vmem:[%s2 + $0x58] sm:$0xf]
    %v43 = vld [vmem:[%s2 + $0x5c] sm:$0xf]
    %v44 = vld [vmem:[%s2 + $0x60] sm:$0xf]
    %v45 = vld [vmem:[%s2 + $0x64] sm:$0xf]
    %v46 = vld [vmem:[%s2 + $0x68] sm:$0xf]
    %v47 = vld [vmem:[%s2 + $0x6c] sm:$0xf]
    %v48 = vld [vmem:[%s2 + $0x70] sm:$0xf]
    %v49 = vld [vmem:[%s2 + $0x74] sm:$0xf]
    %v50 = vld [vmem:[%s2 + $0x78] sm:$0xf]
    %v51 = vld [vmem:[%s2 + $0x7c] sm:$0xf]
    %v52 = vld [vmem:[%s2 + $0x80] sm:$0xf]
    %v53 = vld [vmem:[%s2 + $0x84] sm:$0xf]
    %v54 = vld [vmem:[%s2 + $0x88] sm:$0xf]
    %v55 = vld [vmem:[%s2 + $0x8c] sm:$0xf]
    %v56 = vld [vmem:[%s2 + $0x90] sm:$0xf]
    %v57 = vld [vmem:[%s2 + $0x94] sm:$0xf]
    %v58 = vld [vmem:[%s2 + $0x98] sm:$0xf]
    %v59 = vld [vmem:[%s2 + $0x9c] sm:$0xf]
    %v60 = vld [vmem:[%s2 + $0xa0] sm:$0xf]
    %v61 = vld [vmem:[%s2 + $0xa4] sm:$0xf]
    %v62 = vld [vmem:[%s2 + $0xa8] sm:$0xf]
    %v63 = vld [vmem:[%s2 + $0xac] sm:$0xf]
    %v64 = vld [vmem:[%s2 + $0xb0] sm:$0xf]
    %v65 = vld [vmem:[%s2 + $0xb4] sm:$0xf]
    %v66 = vld [vmem:[%s2 + $0xb8] sm:$0xf]
    %v67 = vld [vmem:[%s2 + $0xbc] sm:$0xf]
    %v68 = vld [vmem:[%s0] sm:$0xf]
    %v69 = vld [vmem:[%s0 + $0x4] sm:$0xf]
    %v70 = vld [vmem:[%s0 + $0x8] sm:$0xf]
    %v71 = vld [vmem:[%s0 + $0xc] sm:$0xf]
    %v72 = vld [vmem:[%s0 + $0x10] sm:$0xf]
    %v73 = vld [vmem:[%s0 + $0x14] sm:$0xf]
    %v74 = vld [vmem:[%s0 + $0x18] sm:$0xf]
    %v75 = vld [vmem:[%s0 + $0x1c] sm:$0xf]
    %v76 = vld [vmem:[%s1] sm:$0xf]
    %v77 = vld [vmem:[%s1 + $0x4] sm:$0xf]
    %v78 = vld [vmem:[%s1 + $0x8] sm:$0xf]
    %v79 = vld [vmem:[%s1 + $0xc] sm:$0xf]
    %v80 = vld [vmem:[%s1 + $0x10] sm:$0xf]
    %v81 = vld [vmem:[%s1 + $0x14] sm:$0xf]
    %v82 = vld [vmem:[%s1 + $0x18] sm:$0xf]
    %v83 = vld [vmem:[%s1 + $0x1c] sm:$0xf]
    %v84 = vld [vmem:[%s1 + $0x20] sm:$0xf]
    %v85 = vld [vmem:[%s1 + $0x24] sm:$0xf]
    %v86 = vld [vmem:[%s1 + $0x28] sm:$0xf]
    %v87 = vld [vmem:[%s1 + $0x2c] sm:$0xf]
    %v88 = vld [vmem:[%s1 + $0x30] sm:$0xf]
    %v89 = vld [vmem:[%s1 + $0x34] sm:$0xf]
    %v90 = vld [vmem:[%s1 + $0x38] sm:$0xf]
    %v91 = vld [vmem:[%s1 + $0x3c] sm:$0xf]
    %v92 = vlaneseq
    %v93 = vshrl.u32 %v92, 7
    %v94 = vsub.s32 0, %v93
    %v95 = vrot.slane %v19, %v94
    %v104 = vunpack.c.l.b16 %v68
    %v105 = vunpack.c.l.b16 %v69
    %v106 = vunpack.c.l.b16 %v70
    %v107 = vunpack.c.l.b16 %v71
    %v108 = vunpack.c.l.b16 %v72
    %v109 = vunpack.c.l.b16 %v73
    %v110 = vunpack.c.l.b16 %v74
    %v111 = vunpack.c.l.b16 %v75
    %v112 = vpack.c.b16 %v105, %v104
    %v113 = vpack.c.b16 %v107, %v106
    %v114 = vpack.c.b16 %v109, %v108
    %v115 = vpack.c.b16 %v111, %v110
    %v136 = vunpack.c.l.b16 %v76
    %v137 = vunpack.c.l.b16 %v77
    %v138 = vunpack.c.l.b16 %v78
    %v139 = vunpack.c.l.b16 %v79
    %v140 = vunpack.c.l.b16 %v80
    %v141 = vunpack.c.l.b16 %v81
    %v142 = vunpack.c.l.b16 %v82
    %v143 = vunpack.c.l.b16 %v83
    %v144 = vunpack.c.l.b16 %v84
    %v145 = vunpack.c.l.b16 %v85
    %v146 = vunpack.c.l.b16 %v86
    %v147 = vunpack.c.l.b16 %v87
    %v148 = vunpack.c.l.b16 %v88
    %v149 = vunpack.c.l.b16 %v89
    %v150 = vunpack.c.l.b16 %v90
    %v151 = vunpack.c.l.b16 %v91
    %v152 = vpack.c.b16 %v137, %v136
    %v153 = vpack.c.b16 %v139, %v138
    %v154 = vpack.c.b16 %v141, %v140
    %v155 = vpack.c.b16 %v143, %v142
    %v156 = vpack.c.b16 %v145, %v144
    %v157 = vpack.c.b16 %v147, %v146
    %v158 = vpack.c.b16 %v149, %v148
    %v159 = vpack.c.b16 %v151, %v150
    %168 = vmatprep.subr.bf16.mxu0 0
    %169 = vmatpush1.bf16.msra.mxu0 %v152
    %170 = vmatprep.subr.bf16.mxu0 0
    %171 = vmatpush1.bf16.msra.mxu0 %v153
    %172 = vmatprep.subr.bf16.mxu0 0
    %173 = vmatpush1.bf16.msra.mxu0 %v154
    %174 = vmatprep.subr.bf16.mxu0 0
    %175 = vmatpush1.bf16.msra.mxu0 %v155
    %176 = vmatprep.subr.bf16.mxu0 0
    %177 = vmatpush1.bf16.msra.mxu0 %v156
    %178 = vmatprep.subr.bf16.mxu0 0
    %179 = vmatpush1.bf16.msra.mxu0 %v157
    %180 = vmatprep.subr.bf16.mxu0 0
    %181 = vmatpush1.bf16.msra.mxu0 %v158
    %182 = vmatprep.subr.bf16.mxu0 0
    %183 = vmatpush1.bf16.msra.mxu0 %v159
    %184 = vmatprep.subr.bf16.mxu0 0
    %185 = vmatpush1.bf16.msra.mxu0 0
    %186 = vmatprep.subr.bf16.mxu0 0
    %187 = vmatpush1.bf16.msra.mxu0 0
    %188 = vmatprep.subr.bf16.mxu0 0
    %189 = vmatpush1.bf16.msra.mxu0 0
    %190 = vmatprep.subr.bf16.mxu0 0
    %191 = vmatpush1.bf16.msra.mxu0 0
    %192 = vmatprep.subr.bf16.mxu0 0
    %193 = vmatpush1.bf16.msra.mxu0 0
    %194 = vmatprep.subr.bf16.mxu0 0
    %195 = vmatpush1.bf16.msra.mxu0 0
    %196 = vmatprep.subr.bf16.mxu0 0
    %197 = vmatpush1.bf16.msra.mxu0 0
    %198 = vmatprep.subr.bf16.mxu0 0
    %199 = vmatpush1.bf16.msra.mxu0 0
    %200 = vmatprep.mubr.bf16.mxu0 0
    %201 = vmatmul.mubr.bf16.gmra.mrb[0].mxu0 %v112
    %v202 = vpop.f32.mrb[0].mxu0
    %v203 = vadd.f32 %v95, %v202
    %v204 = vpop.f32.mrb[0].mxu0
    %v205 = vpop.f32.mrb[0].mxu0
    %v206 = vadd.f32 %v95, %v205
    %v207 = vpop.f32.mrb[0].mxu0
    %208 = vmatprep.mubr.bf16.mxu0 0
    %209 = vmatmul.mubr.bf16.gmra.mrb[0].mxu0 %v113
    %v210 = vpop.f32.mrb[0].mxu0
    %v211 = vadd.f32 %v95, %v210
    %v212 = vpop.f32.mrb[0].mxu0
    %v213 = vpop.f32.mrb[0].mxu0
    %v214 = vadd.f32 %v95, %v213
    %v215 = vpop.f32.mrb[0].mxu0
    %216 = vmatprep.mubr.bf16.mxu0 0
    %217 = vmatmul.mubr.bf16.gmra.mrb[0].mxu0 %v114
    %v218 = vpop.f32.mrb[0].mxu0
    %v219 = vadd.f32 %v95, %v218
    %v220 = vpop.f32.mrb[0].mxu0
    %v221 = vpop.f32.mrb[0].mxu0
    %v222 = vadd.f32 %v95, %v221
    %v223 = vpop.f32.mrb[0].mxu0
    %224 = vmatprep.mubr.bf16.mxu0 0
    %225 = vmatmul.mubr.bf16.gmra.mrb[0].mxu0 %v115
    %v226 = vpop.f32.mrb[0].mxu0
    %v227 = vadd.f32 %v95, %v226
    %v228 = vpop.f32.mrb[0].mxu0
    %v229 = vpop.f32.mrb[0].mxu0
    %v230 = vadd.f32 %v95, %v229
    %v231 = vpop.f32.mrb[0].mxu0
    %232 = vdwg.mxu0
    %v233 = vadd.f32 %v203, %v206
    %v234 = vadd.f32 %v233, %v211
    %v235 = vadd.f32 %v234, %v214
    %v236 = vadd.f32 %v235, %v219
    %v237 = vadd.f32 %v236, %v222
    %v238 = vadd.f32 %v237, %v227
    %v239 = vadd.f32 %v238, %v230
    %v240 = vrot.slane %v239, 4
    %v241 = vadd.f32 %v239, %v240
    %v242 = vrot.slane %v241, 2
    %v243 = vadd.f32 %v241, %v242
    %v244 = vrot.slane %v243, 1
    %v245 = vadd.f32 %v243, %v244
    %v246 = vmul.f32 %v245, 0.015625
    %v247 = vmul.f32 %v203, %v203
    %v248 = vmul.f32 %v206, %v206
    %v249 = vmul.f32 %v211, %v211
    %v250 = vmul.f32 %v214, %v214
    %v251 = vmul.f32 %v219, %v219
    %v252 = vmul.f32 %v222, %v222
    %v253 = vmul.f32 %v227, %v227
    %v254 = vmul.f32 %v230, %v230
    %v255 = vadd.f32 %v247, %v248
    %v256 = vadd.f32 %v255, %v249
    %v257 = vadd.f32 %v256, %v250
    %v258 = vadd.f32 %v257, %v251
    %v259 = vadd.f32 %v258, %v252
    %v260 = vadd.f32 %v259, %v253
    %v261 = vadd.f32 %v260, %v254
    %v262 = vrot.slane %v261, 4
    %v263 = vadd.f32 %v261, %v262
    %v264 = vrot.slane %v263, 2
    %v265 = vadd.f32 %v263, %v264
    %v266 = vrot.slane %v265, 1
    %v267 = vadd.f32 %v265, %v266
    %v268 = vmul.f32 %v267, 0.015625
    %v269 = vmul.f32 %v246, %v246
    %v270 = vsub.f32 %v268, %v269
    %v271 = vsub.f32 %v203, %v246
    %v272 = vsub.f32 %v206, %v246
    %v273 = vsub.f32 %v211, %v246
    %v274 = vsub.f32 %v214, %v246
    %v275 = vsub.f32 %v219, %v246
    %v276 = vsub.f32 %v222, %v246
    %v277 = vsub.f32 %v227, %v246
    %v278 = vsub.f32 %v230, %v246
    %v279 = vadd.f32 %v270, 1e-05
    %v280 = vrsqrt.pop %v279
    %v281 = vmul.f32 %v271, %v280
    %v282 = vmul.f32 %v272, %v280
    %v283 = vmul.f32 %v273, %v280
    %v284 = vmul.f32 %v274, %v280
    %v285 = vmul.f32 %v275, %v280
    %v286 = vmul.f32 %v276, %v280
    %v287 = vmul.f32 %v277, %v280
    %v288 = vmul.f32 %v278, %v280
    %v289 = vlaneseq
    %v290 = vshrl.u32 %v289, 7
    %v291 = vsub.s32 1, %v290
    %v292 = vrot.slane %v19, %v291
    %v293 = vmul.f32 %v292, %v281
    %v294 = vmul.f32 %v292, %v282
    %v295 = vmul.f32 %v292, %v283
    %v296 = vmul.f32 %v292, %v284
    %v297 = vmul.f32 %v292, %v285
    %v298 = vmul.f32 %v292, %v286
    %v299 = vmul.f32 %v292, %v287
    %v300 = vmul.f32 %v292, %v288
    %v301 = vlaneseq
    %v302 = vshrl.u32 %v301, 7
    %v303 = vsub.s32 2, %v302
    %v304 = vrot.slane %v19, %v303
    %v305 = vadd.f32 %v293, %v304
    %v306 = vadd.f32 %v294, %v304
    %v307 = vadd.f32 %v295, %v304
    %v308 = vadd.f32 %v296, %v304
    %v309 = vadd.f32 %v297, %v304
    %v310 = vadd.f32 %v298, %v304
    %v311 = vadd.f32 %v299, %v304
    %v312 = vadd.f32 %v300, %v304
    %v313 = vmax.f32 %v305, 0.0
    %v314 = vmax.f32 %v306, 0.0
    %v315 = vmax.f32 %v307, 0.0
    %v316 = vmax.f32 %v308, 0.0
    %v317 = vmax.f32 %v309, 0.0
    %v318 = vmax.f32 %v310, 0.0
    %v319 = vmax.f32 %v311, 0.0
    %v320 = vmax.f32 %v312, 0.0
    %v329 = vcombine.high %v313, %v313
    %v330 = vcombine.high %v314, %v314
    %v331 = vcombine.high %v315, %v315
    %v332 = vcombine.high %v316, %v316
    %v333 = vcombine.high %v317, %v317
    %v334 = vcombine.high %v318, %v318
    %v335 = vcombine.high %v319, %v319
    %v336 = vcombine.high %v320, %v320
    %vm345 = vcmask 1043456
    %v346 = vsel %vm345, %v313, -inf
    %v347 = vrot.slane %v346, 4
    %v348 = vmax.f32 %v346, %v347
    %v349 = vrot.slane %v348, 2
    %v350 = vmax.f32 %v348, %v349
    %v351 = vrot.slane %v350, 1
    %v352 = vmax.f32 %v350, %v351
    %v353 = vsel %vm345, %v329, -inf
    %v354 = vrot.slane %v353, 4
    %v355 = vmax.f32 %v353, %v354
    %v356 = vrot.slane %v355, 2
    %v357 = vmax.f32 %v355, %v356
    %v358 = vrot.slane %v357, 1
    %v359 = vmax.f32 %v357, %v358
    %v360 = vsel %vm345, %v314, -inf
    %v361 = vrot.slane %v360, 4
    %v362 = vmax.f32 %v360, %v361
    %v363 = vrot.slane %v362, 2
    %v364 = vmax.f32 %v362, %v363
    %v365 = vrot.slane %v364, 1
    %v366 = vmax.f32 %v364, %v365
    %v367 = vsel %vm345, %v330, -inf
    %v368 = vrot.slane %v367, 4
    %v369 = vmax.f32 %v367, %v368
    %v370 = vrot.slane %v369, 2
    %v371 = vmax.f32 %v369, %v370
    %v372 = vrot.slane %v371, 1
    %v373 = vmax.f32 %v371, %v372
    %v374 = vsel %vm345, %v315, -inf
    %v375 = vrot.slane %v374, 4
    %v376 = vmax.f32 %v374, %v375
    %v377 = vrot.slane %v376, 2
    %v378 = vmax.f32 %v376, %v377
    %v379 = vrot.slane %v378, 1
    %v380 = vmax.f32 %v378, %v379
    %v381 = vsel %vm345, %v331, -inf
    %v382 = vrot.slane %v381, 4
    %v383 = vmax.f32 %v381, %v382
    %v384 = vrot.slane %v383, 2
    %v385 = vmax.f32 %v383, %v384
    %v386 = vrot.slane %v385, 1
    %v387 = vmax.f32 %v385, %v386
    %v388 = vsel %vm345, %v316, -inf
    %v389 = vrot.slane %v388, 4
    %v390 = vmax.f32 %v388, %v389
    %v391 = vrot.slane %v390, 2
    %v392 = vmax.f32 %v390, %v391
    %v393 = vrot.slane %v392, 1
    %v394 = vmax.f32 %v392, %v393
    %v395 = vsel %vm345, %v332, -inf
    %v396 = vrot.slane %v395, 4
    %v397 = vmax.f32 %v395, %v396
    %v398 = vrot.slane %v397, 2
    %v399 = vmax.f32 %v397, %v398
    %v400 = vrot.slane %v399, 1
    %v401 = vmax.f32 %v399, %v400
    %v402 = vsel %vm345, %v317, -inf
    %v403 = vrot.slane %v402, 4
    %v404 = vmax.f32 %v402, %v403
    %v405 = vrot.slane %v404, 2
    %v406 = vmax.f32 %v404, %v405
    %v407 = vrot.slane %v406, 1
    %v408 = vmax.f32 %v406, %v407
    %v409 = vsel %vm345, %v333, -inf
    %v410 = vrot.slane %v409, 4
    %v411 = vmax.f32 %v409, %v410
    %v412 = vrot.slane %v411, 2
    %v413 = vmax.f32 %v411, %v412
    %v414 = vrot.slane %v413, 1
    %v415 = vmax.f32 %v413, %v414
    %v416 = vsel %vm345, %v318, -inf
    %v417 = vrot.slane %v416, 4
    %v418 = vmax.f32 %v416, %v417
    %v419 = vrot.slane %v418, 2
    %v420 = vmax.f32 %v418, %v419
    %v421 = vrot.slane %v420, 1
    %v422 = vmax.f32 %v420, %v421
    %v423 = vsel %vm345, %v334, -inf
    %v424 = vrot.slane %v423, 4
    %v425 = vmax.f32 %v423, %v424
    %v426 = vrot.slane %v425, 2
    %v427 = vmax.f32 %v425, %v426
    %v428 = vrot.slane %v427, 1
    %v429 = vmax.f32 %v427, %v428
    %v430 = vsel %vm345, %v319, -inf
    %v431 = vrot.slane %v430, 4
    %v432 = vmax.f32 %v430, %v431
    %v433 = vrot.slane %v432, 2
    %v434 = vmax.f32 %v432, %v433
    %v435 = vrot.slane %v434, 1
    %v436 = vmax.f32 %v434, %v435
    %v437 = vsel %vm345, %v335, -inf
    %v438 = vrot.slane %v437, 4
    %v439 = vmax.f32 %v437, %v438
    %v440 = vrot.slane %v439, 2
    %v441 = vmax.f32 %v439, %v440
    %v442 = vrot.slane %v441, 1
    %v443 = vmax.f32 %v441, %v442
    %v444 = vsel %vm345, %v320, -inf
    %v445 = vrot.slane %v444, 4
    %v446 = vmax.f32 %v444, %v445
    %v447 = vrot.slane %v446, 2
    %v448 = vmax.f32 %v446, %v447
    %v449 = vrot.slane %v448, 1
    %v450 = vmax.f32 %v448, %v449
    %v451 = vsel %vm345, %v336, -inf
    %v452 = vrot.slane %v451, 4
    %v453 = vmax.f32 %v451, %v452
    %v454 = vrot.slane %v453, 2
    %v455 = vmax.f32 %v453, %v454
    %v456 = vrot.slane %v455, 1
    %v457 = vmax.f32 %v455, %v456
    %v458 = vpack.c.bf16 %v352, %v352
    %v459 = vpack.c.bf16 %v359, %v359
    %v460 = vpack.c.bf16 %v366, %v366
    %v461 = vpack.c.bf16 %v373, %v373
    %v462 = vpack.c.bf16 %v380, %v380
    %v463 = vpack.c.bf16 %v387, %v387
    %v464 = vpack.c.bf16 %v394, %v394
    %v465 = vpack.c.bf16 %v401, %v401
    %v466 = vpack.c.bf16 %v408, %v408
    %v467 = vpack.c.bf16 %v415, %v415
    %v468 = vpack.c.bf16 %v422, %v422
    %v469 = vpack.c.bf16 %v429, %v429
    %v470 = vpack.c.bf16 %v436, %v436
    %v471 = vpack.c.bf16 %v443, %v443
    %v472 = vpack.c.bf16 %v450, %v450
    %v473 = vpack.c.bf16 %v457, %v457
    %v474 = vlaneseq
    %v475 = vshrl.u32 %v474, 7
    %v476 = vsub.s32 3, %v475
    %v477 = vrot.slane %v19, %v476
    %v494 = vunpack.c.l.b16 %v458
    %v495 = vunpack.c.l.b16 %v459
    %v496 = vunpack.c.l.b16 %v460
    %v497 = vunpack.c.l.b16 %v461
    %v498 = vunpack.c.l.b16 %v462
    %v499 = vunpack.c.l.b16 %v463
    %v500 = vunpack.c.l.b16 %v464
    %v501 = vunpack.c.l.b16 %v465
    %v502 = vunpack.c.l.b16 %v466
    %v503 = vunpack.c.l.b16 %v467
    %v504 = vunpack.c.l.b16 %v468
    %v505 = vunpack.c.l.b16 %v469
    %v506 = vunpack.c.l.b16 %v470
    %v507 = vunpack.c.l.b16 %v471
    %v508 = vunpack.c.l.b16 %v472
    %v509 = vunpack.c.l.b16 %v473
    %vm510 = vcmask 1041409
    %v511 = vsel %vm510, %v495, %v494
    %vm512 = vcmask 1042434
    %v513 = vsel %vm512, %v496, %v511
    %vm514 = vcmask 1043459
    %v515 = vsel %vm514, %v497, %v513
    %vm516 = vcmask 1044484
    %v517 = vsel %vm516, %v498, %v515
    %vm518 = vcmask 1045509
    %v519 = vsel %vm518, %v499, %v517
    %vm520 = vcmask 1046534
    %v521 = vsel %vm520, %v500, %v519
    %vm522 = vcmask 1047559
    %v523 = vsel %vm522, %v501, %v521
    %v524 = vsel %vm510, %v503, %v502
    %v525 = vsel %vm512, %v504, %v524
    %v526 = vsel %vm514, %v505, %v525
    %v527 = vsel %vm516, %v506, %v526
    %v528 = vsel %vm518, %v507, %v527
    %v529 = vsel %vm520, %v508, %v528
    %v530 = vsel %vm522, %v509, %v529
    %v531 = vpack.c.b16 %v530, %v523
    %v549 = vunpack.c.l.b16 %v20
    %v550 = vunpack.c.l.b16 %v21
    %v551 = vunpack.c.l.b16 %v22
    %v552 = vunpack.c.l.b16 %v23
    %v553 = vunpack.c.l.b16 %v24
    %v554 = vunpack.c.l.b16 %v25
    %v555 = vunpack.c.l.b16 %v26
    %v556 = vunpack.c.l.b16 %v27
    %v557 = vunpack.c.l.b16 %v28
    %v558 = vunpack.c.l.b16 %v29
    %v559 = vunpack.c.l.b16 %v30
    %v560 = vunpack.c.l.b16 %v31
    %v561 = vunpack.c.l.b16 %v32
    %v562 = vunpack.c.l.b16 %v33
    %v563 = vunpack.c.l.b16 %v34
    %v564 = vunpack.c.l.b16 %v35
    %v565 = vpack.c.b16 %v550, %v549
    %v566 = vpack.c.b16 %v552, %v551
    %v567 = vpack.c.b16 %v554, %v553
    %v568 = vpack.c.b16 %v556, %v555
    %v569 = vpack.c.b16 %v558, %v557
    %v570 = vpack.c.b16 %v560, %v559
    %v571 = vpack.c.b16 %v562, %v561
    %v572 = vpack.c.b16 %v564, %v563
    %581 = vmatprep.subr.bf16.mxu0 0
    %582 = vmatpush1.bf16.msra.mxu0 %v565
    %583 = vmatprep.subr.bf16.mxu0 0
    %584 = vmatpush1.bf16.msra.mxu0 %v566
    %585 = vmatprep.subr.bf16.mxu0 0
    %586 = vmatpush1.bf16.msra.mxu0 %v567
    %587 = vmatprep.subr.bf16.mxu0 0
    %588 = vmatpush1.bf16.msra.mxu0 %v568
    %589 = vmatprep.subr.bf16.mxu0 0
    %590 = vmatpush1.bf16.msra.mxu0 %v569
    %591 = vmatprep.subr.bf16.mxu0 0
    %592 = vmatpush1.bf16.msra.mxu0 %v570
    %593 = vmatprep.subr.bf16.mxu0 0
    %594 = vmatpush1.bf16.msra.mxu0 %v571
    %595 = vmatprep.subr.bf16.mxu0 0
    %596 = vmatpush1.bf16.msra.mxu0 %v572
    %597 = vmatprep.subr.bf16.mxu0 0
    %598 = vmatpush1.bf16.msra.mxu0 0
    %599 = vmatprep.subr.bf16.mxu0 0
    %600 = vmatpush1.bf16.msra.mxu0 0
    %601 = vmatprep.subr.bf16.mxu0 0
    %602 = vmatpush1.bf16.msra.mxu0 0
    %603 = vmatprep.subr.bf16.mxu0 0
    %604 = vmatpush1.bf16.msra.mxu0 0
    %605 = vmatprep.subr.bf16.mxu0 0
    %606 = vmatpush1.bf16.msra.mxu0 0
    %607 = vmatprep.subr.bf16.mxu0 0
    %608 = vmatpush1.bf16.msra.mxu0 0
    %609 = vmatprep.subr.bf16.mxu0 0
    %610 = vmatpush1.bf16.msra.mxu0 0
    %611 = vmatprep.subr.bf16.mxu0 0
    %612 = vmatpush1.bf16.msra.mxu0 0
    %613 = vmatprep.mubr.bf16.mxu0 0
    %614 = vmatmul.mubr.bf16.gmra.mrb[0].mxu0 %v531
    %v615 = vpop.f32.mrb[0].mxu0
    %v616 = vadd.f32 %v477, %v615
    %v617 = vpop.f32.mrb[0].mxu0
    %v618 = vpop.f32.mrb[0].mxu0
    %v619 = vadd.f32 %v477, %v618
    %v620 = vpop.f32.mrb[0].mxu0
    %621 = vdwg.mxu0
    %v622 = vlaneseq
    %v623 = vand.u32 %v622, 127
    %vm624 = vcmp.lt.s32.totalorder %v623, 32
    %v625 = vtanh.pop %v616
    %v626 = vsel %vm624, %v625, 0.0
    %v627 = vpack.c.bf16 %v626, %v626
    %v644 = vunpack.c.l.b16 %v36
    %v645 = vunpack.c.l.b16 %v37
    %v646 = vunpack.c.l.b16 %v38
    %v647 = vunpack.c.l.b16 %v39
    %v648 = vunpack.c.l.b16 %v40
    %v649 = vunpack.c.l.b16 %v41
    %v650 = vunpack.c.l.b16 %v42
    %v651 = vunpack.c.l.b16 %v43
    %v652 = vunpack.c.l.b16 %v44
    %v653 = vunpack.c.l.b16 %v45
    %v654 = vunpack.c.l.b16 %v46
    %v655 = vunpack.c.l.b16 %v47
    %v656 = vunpack.c.l.b16 %v48
    %v657 = vunpack.c.l.b16 %v49
    %v658 = vunpack.c.l.b16 %v50
    %v659 = vunpack.c.l.b16 %v51
    %v660 = vpack.c.b16 %v645, %v644
    %v661 = vpack.c.b16 %v647, %v646
    %v662 = vpack.c.b16 %v649, %v648
    %v663 = vpack.c.b16 %v651, %v650
    %v664 = vpack.c.b16 %v653, %v652
    %v665 = vpack.c.b16 %v655, %v654
    %v666 = vpack.c.b16 %v657, %v656
    %v667 = vpack.c.b16 %v659, %v658
    %v677 = vrot.slane %v616, 2
    %679 = vmatprep.subr.bf16.mxu0 0
    %680 = vmatpush1.bf16.msra.mxu0 %v660
    %681 = vmatprep.subr.bf16.mxu0 0
    %682 = vmatpush1.bf16.msra.mxu0 %v661
    %683 = vmatprep.subr.bf16.mxu0 0
    %684 = vmatpush1.bf16.msra.mxu0 %v662
    %685 = vmatprep.subr.bf16.mxu0 0
    %686 = vmatpush1.bf16.msra.mxu0 %v663
    %687 = vmatprep.subr.bf16.mxu0 0
    %688 = vmatpush1.bf16.msra.mxu0 %v664
    %689 = vmatprep.subr.bf16.mxu0 0
    %690 = vmatpush1.bf16.msra.mxu0 %v665
    %691 = vmatprep.subr.bf16.mxu0 0
    %692 = vmatpush1.bf16.msra.mxu0 %v666
    %693 = vmatprep.subr.bf16.mxu0 0
    %694 = vmatpush1.bf16.msra.mxu0 %v667
    %695 = vmatprep.subr.bf16.mxu0 0
    %696 = vmatpush1.bf16.msra.mxu0 0
    %697 = vmatprep.subr.bf16.mxu0 0
    %698 = vmatpush1.bf16.msra.mxu0 0
    %699 = vmatprep.subr.bf16.mxu0 0
    %700 = vmatpush1.bf16.msra.mxu0 0
    %701 = vmatprep.subr.bf16.mxu0 0
    %702 = vmatpush1.bf16.msra.mxu0 0
    %703 = vmatprep.subr.bf16.mxu0 0
    %704 = vmatpush1.bf16.msra.mxu0 0
    %705 = vmatprep.subr.bf16.mxu0 0
    %706 = vmatpush1.bf16.msra.mxu0 0
    %707 = vmatprep.subr.bf16.mxu0 0
    %708 = vmatpush1.bf16.msra.mxu0 0
    %709 = vmatprep.subr.bf16.mxu0 0
    %710 = vmatpush1.bf16.msra.mxu0 0
    %711 = vmatprep.mubr.bf16.mxu0 0
    %712 = vmatmul.mubr.bf16.gmra.mrb[0].mxu0 %v627
    %v713 = vpop.f32.mrb[0].mxu0
    %v714 = vadd.f32 %v677, %v713
    %v715 = vpop.f32.mrb[0].mxu0
    %v716 = vpop.f32.mrb[0].mxu0
    %v717 = vpop.f32.mrb[0].mxu0
    %718 = vdwg.mxu0
    %v719 = vtanh.pop %v714
    %v720 = vmax.f32 %v719, -1.0
    %v721 = vpack.c.bf16 %v719, %v719
    %v722 = vrot.slane %v616, 4
    %724 = vmatprep.subr.bf16.mxu0 0
    %725 = vmatpush1.bf16.msra.mxu0 %v660
    %726 = vmatprep.subr.bf16.mxu0 0
    %727 = vmatpush1.bf16.msra.mxu0 %v661
    %728 = vmatprep.subr.bf16.mxu0 0
    %729 = vmatpush1.bf16.msra.mxu0 %v662
    %730 = vmatprep.subr.bf16.mxu0 0
    %731 = vmatpush1.bf16.msra.mxu0 %v663
    %732 = vmatprep.subr.bf16.mxu0 0
    %733 = vmatpush1.bf16.msra.mxu0 %v664
    %734 = vmatprep.subr.bf16.mxu0 0
    %735 = vmatpush1.bf16.msra.mxu0 %v665
    %736 = vmatprep.subr.bf16.mxu0 0
    %737 = vmatpush1.bf16.msra.mxu0 %v666
    %738 = vmatprep.subr.bf16.mxu0 0
    %739 = vmatpush1.bf16.msra.mxu0 %v667
    %740 = vmatprep.subr.bf16.mxu0 0
    %741 = vmatpush1.bf16.msra.mxu0 0
    %742 = vmatprep.subr.bf16.mxu0 0
    %743 = vmatpush1.bf16.msra.mxu0 0
    %744 = vmatprep.subr.bf16.mxu0 0
    %745 = vmatpush1.bf16.msra.mxu0 0
    %746 = vmatprep.subr.bf16.mxu0 0
    %747 = vmatpush1.bf16.msra.mxu0 0
    %748 = vmatprep.subr.bf16.mxu0 0
    %749 = vmatpush1.bf16.msra.mxu0 0
    %750 = vmatprep.subr.bf16.mxu0 0
    %751 = vmatpush1.bf16.msra.mxu0 0
    %752 = vmatprep.subr.bf16.mxu0 0
    %753 = vmatpush1.bf16.msra.mxu0 0
    %754 = vmatprep.subr.bf16.mxu0 0
    %755 = vmatpush1.bf16.msra.mxu0 0
    %756 = vmatprep.mubr.bf16.mxu0 0
    %757 = vmatmul.mubr.bf16.gmra.mrb[0].mxu0 %v721
    %v758 = vpop.f32.mrb[0].mxu0
    %v759 = vadd.f32 %v722, %v758
    %v760 = vpop.f32.mrb[0].mxu0
    %v761 = vpop.f32.mrb[0].mxu0
    %v762 = vpop.f32.mrb[0].mxu0
    %763 = vdwg.mxu0
    %v764 = vtanh.pop %v759
    %v765 = vmax.f32 %v720, %v764
    %v766 = vpack.c.bf16 %v764, %v764
    %v767 = vrot.slane %v616, 6
    %769 = vmatprep.subr.bf16.mxu0 0
    %770 = vmatpush1.bf16.msra.mxu0 %v660
    %771 = vmatprep.subr.bf16.mxu0 0
    %772 = vmatpush1.bf16.msra.mxu0 %v661
    %773 = vmatprep.subr.bf16.mxu0 0
    %774 = vmatpush1.bf16.msra.mxu0 %v662
    %775 = vmatprep.subr.bf16.mxu0 0
    %776 = vmatpush1.bf16.msra.mxu0 %v663
    %777 = vmatprep.subr.bf16.mxu0 0
    %778 = vmatpush1.bf16.msra.mxu0 %v664
    %779 = vmatprep.subr.bf16.mxu0 0
    %780 = vmatpush1.bf16.msra.mxu0 %v665
    %781 = vmatprep.subr.bf16.mxu0 0
    %782 = vmatpush1.bf16.msra.mxu0 %v666
    %783 = vmatprep.subr.bf16.mxu0 0
    %784 = vmatpush1.bf16.msra.mxu0 %v667
    %785 = vmatprep.subr.bf16.mxu0 0
    %786 = vmatpush1.bf16.msra.mxu0 0
    %787 = vmatprep.subr.bf16.mxu0 0
    %788 = vmatpush1.bf16.msra.mxu0 0
    %789 = vmatprep.subr.bf16.mxu0 0
    %790 = vmatpush1.bf16.msra.mxu0 0
    %791 = vmatprep.subr.bf16.mxu0 0
    %792 = vmatpush1.bf16.msra.mxu0 0
    %793 = vmatprep.subr.bf16.mxu0 0
    %794 = vmatpush1.bf16.msra.mxu0 0
    %795 = vmatprep.subr.bf16.mxu0 0
    %796 = vmatpush1.bf16.msra.mxu0 0
    %797 = vmatprep.subr.bf16.mxu0 0
    %798 = vmatpush1.bf16.msra.mxu0 0
    %799 = vmatprep.subr.bf16.mxu0 0
    %800 = vmatpush1.bf16.msra.mxu0 0
    %801 = vmatprep.mubr.bf16.mxu0 0
    %802 = vmatmul.mubr.bf16.gmra.mrb[0].mxu0 %v766
    %v803 = vpop.f32.mrb[0].mxu0
    %v804 = vadd.f32 %v767, %v803
    %v805 = vpop.f32.mrb[0].mxu0
    %v806 = vpop.f32.mrb[0].mxu0
    %v807 = vpop.f32.mrb[0].mxu0
    %808 = vdwg.mxu0
    %v809 = vtanh.pop %v804
    %v810 = vmax.f32 %v765, %v809
    %v811 = vpack.c.bf16 %v809, %v809
    %812 = vmatprep.subr.bf16.mxu0 0
    %813 = vmatpush1.bf16.msra.mxu0 %v660
    %814 = vmatprep.subr.bf16.mxu0 0
    %815 = vmatpush1.bf16.msra.mxu0 %v661
    %816 = vmatprep.subr.bf16.mxu0 0
    %817 = vmatpush1.bf16.msra.mxu0 %v662
    %818 = vmatprep.subr.bf16.mxu0 0
    %819 = vmatpush1.bf16.msra.mxu0 %v663
    %820 = vmatprep.subr.bf16.mxu0 0
    %821 = vmatpush1.bf16.msra.mxu0 %v664
    %822 = vmatprep.subr.bf16.mxu0 0
    %823 = vmatpush1.bf16.msra.mxu0 %v665
    %824 = vmatprep.subr.bf16.mxu0 0
    %825 = vmatpush1.bf16.msra.mxu0 %v666
    %826 = vmatprep.subr.bf16.mxu0 0
    %827 = vmatpush1.bf16.msra.mxu0 %v667
    %828 = vmatprep.subr.bf16.mxu0 0
    %829 = vmatpush1.bf16.msra.mxu0 0
    %830 = vmatprep.subr.bf16.mxu0 0
    %831 = vmatpush1.bf16.msra.mxu0 0
    %832 = vmatprep.subr.bf16.mxu0 0
    %833 = vmatpush1.bf16.msra.mxu0 0
    %834 = vmatprep.subr.bf16.mxu0 0
    %835 = vmatpush1.bf16.msra.mxu0 0
    %836 = vmatprep.subr.bf16.mxu0 0
    %837 = vmatpush1.bf16.msra.mxu0 0
    %838 = vmatprep.subr.bf16.mxu0 0
    %839 = vmatpush1.bf16.msra.mxu0 0
    %840 = vmatprep.subr.bf16.mxu0 0
    %841 = vmatpush1.bf16.msra.mxu0 0
    %842 = vmatprep.subr.bf16.mxu0 0
    %843 = vmatpush1.bf16.msra.mxu0 0
    %844 = vmatprep.mubr.bf16.mxu0 0
    %845 = vmatmul.mubr.bf16.gmra.mrb[0].mxu0 %v811
    %v846 = vpop.f32.mrb[0].mxu0
    %v847 = vadd.f32 %v619, %v846
    %v848 = vpop.f32.mrb[0].mxu0
    %v849 = vpop.f32.mrb[0].mxu0
    %v850 = vpop.f32.mrb[0].mxu0
    %851 = vdwg.mxu0
    %v852 = vtanh.pop %v847
    %v853 = vmax.f32 %v810, %v852
    %v854 = vpack.c.bf16 %v852, %v852
    %v856 = vrot.slane %v619, 2
    %858 = vmatprep.subr.bf16.mxu0 0
    %859 = vmatpush1.bf16.msra.mxu0 %v660
    %860 = vmatprep.subr.bf16.mxu0 0
    %861 = vmatpush1.bf16.msra.mxu0 %v661
    %862 = vmatprep.subr.bf16.mxu0 0
    %863 = vmatpush1.bf16.msra.mxu0 %v662
    %864 = vmatprep.subr.bf16.mxu0 0
    %865 = vmatpush1.bf16.msra.mxu0 %v663
    %866 = vmatprep.subr.bf16.mxu0 0
    %867 = vmatpush1.bf16.msra.mxu0 %v664
    %868 = vmatprep.subr.bf16.mxu0 0
    %869 = vmatpush1.bf16.msra.mxu0 %v665
    %870 = vmatprep.subr.bf16.mxu0 0
    %871 = vmatpush1.bf16.msra.mxu0 %v666
    %872 = vmatprep.subr.bf16.mxu0 0
    %873 = vmatpush1.bf16.msra.mxu0 %v667
    %874 = vmatprep.subr.bf16.mxu0 0
    %875 = vmatpush1.bf16.msra.mxu0 0
    %876 = vmatprep.subr.bf16.mxu0 0
    %877 = vmatpush1.bf16.msra.mxu0 0
    %878 = vmatprep.subr.bf16.mxu0 0
    %879 = vmatpush1.bf16.msra.mxu0 0
    %880 = vmatprep.subr.bf16.mxu0 0
    %881 = vmatpush1.bf16.msra.mxu0 0
    %882 = vmatprep.subr.bf16.mxu0 0
    %883 = vmatpush1.bf16.msra.mxu0 0
    %884 = vmatprep.subr.bf16.mxu0 0
    %885 = vmatpush1.bf16.msra.mxu0 0
    %886 = vmatprep.subr.bf16.mxu0 0
    %887 = vmatpush1.bf16.msra.mxu0 0
    %888 = vmatprep.subr.bf16.mxu0 0
    %889 = vmatpush1.bf16.msra.mxu0 0
    %890 = vmatprep.mubr.bf16.mxu0 0
    %891 = vmatmul.mubr.bf16.gmra.mrb[0].mxu0 %v854
    %v892 = vpop.f32.mrb[0].mxu0
    %v893 = vadd.f32 %v856, %v892
    %v894 = vpop.f32.mrb[0].mxu0
    %v895 = vpop.f32.mrb[0].mxu0
    %v896 = vpop.f32.mrb[0].mxu0
    %897 = vdwg.mxu0
    %v898 = vtanh.pop %v893
    %v899 = vmax.f32 %v853, %v898
    %v900 = vpack.c.bf16 %v898, %v898
    %v901 = vrot.slane %v619, 4
    %903 = vmatprep.subr.bf16.mxu0 0
    %904 = vmatpush1.bf16.msra.mxu0 %v660
    %905 = vmatprep.subr.bf16.mxu0 0
    %906 = vmatpush1.bf16.msra.mxu0 %v661
    %907 = vmatprep.subr.bf16.mxu0 0
    %908 = vmatpush1.bf16.msra.mxu0 %v662
    %909 = vmatprep.subr.bf16.mxu0 0
    %910 = vmatpush1.bf16.msra.mxu0 %v663
    %911 = vmatprep.subr.bf16.mxu0 0
    %912 = vmatpush1.bf16.msra.mxu0 %v664
    %913 = vmatprep.subr.bf16.mxu0 0
    %914 = vmatpush1.bf16.msra.mxu0 %v665
    %915 = vmatprep.subr.bf16.mxu0 0
    %916 = vmatpush1.bf16.msra.mxu0 %v666
    %917 = vmatprep.subr.bf16.mxu0 0
    %918 = vmatpush1.bf16.msra.mxu0 %v667
    %919 = vmatprep.subr.bf16.mxu0 0
    %920 = vmatpush1.bf16.msra.mxu0 0
    %921 = vmatprep.subr.bf16.mxu0 0
    %922 = vmatpush1.bf16.msra.mxu0 0
    %923 = vmatprep.subr.bf16.mxu0 0
    %924 = vmatpush1.bf16.msra.mxu0 0
    %925 = vmatprep.subr.bf16.mxu0 0
    %926 = vmatpush1.bf16.msra.mxu0 0
    %927 = vmatprep.subr.bf16.mxu0 0
    %928 = vmatpush1.bf16.msra.mxu0 0
    %929 = vmatprep.subr.bf16.mxu0 0
    %930 = vmatpush1.bf16.msra.mxu0 0
    %931 = vmatprep.subr.bf16.mxu0 0
    %932 = vmatpush1.bf16.msra.mxu0 0
    %933 = vmatprep.subr.bf16.mxu0 0
    %934 = vmatpush1.bf16.msra.mxu0 0
    %935 = vmatprep.mubr.bf16.mxu0 0
    %936 = vmatmul.mubr.bf16.gmra.mrb[0].mxu0 %v900
    %v937 = vpop.f32.mrb[0].mxu0
    %v938 = vadd.f32 %v901, %v937
    %v939 = vpop.f32.mrb[0].mxu0
    %v940 = vpop.f32.mrb[0].mxu0
    %v941 = vpop.f32.mrb[0].mxu0
    %942 = vdwg.mxu0
    %v943 = vtanh.pop %v938
    %v944 = vmax.f32 %v899, %v943
    %v945 = vpack.c.bf16 %v943, %v943
    %v946 = vrot.slane %v619, 6
    %948 = vmatprep.subr.bf16.mxu0 0
    %949 = vmatpush1.bf16.msra.mxu0 %v660
    %950 = vmatprep.subr.bf16.mxu0 0
    %951 = vmatpush1.bf16.msra.mxu0 %v661
    %952 = vmatprep.subr.bf16.mxu0 0
    %953 = vmatpush1.bf16.msra.mxu0 %v662
    %954 = vmatprep.subr.bf16.mxu0 0
    %955 = vmatpush1.bf16.msra.mxu0 %v663
    %956 = vmatprep.subr.bf16.mxu0 0
    %957 = vmatpush1.bf16.msra.mxu0 %v664
    %958 = vmatprep.subr.bf16.mxu0 0
    %959 = vmatpush1.bf16.msra.mxu0 %v665
    %960 = vmatprep.subr.bf16.mxu0 0
    %961 = vmatpush1.bf16.msra.mxu0 %v666
    %962 = vmatprep.subr.bf16.mxu0 0
    %963 = vmatpush1.bf16.msra.mxu0 %v667
    %964 = vmatprep.subr.bf16.mxu0 0
    %965 = vmatpush1.bf16.msra.mxu0 0
    %966 = vmatprep.subr.bf16.mxu0 0
    %967 = vmatpush1.bf16.msra.mxu0 0
    %968 = vmatprep.subr.bf16.mxu0 0
    %969 = vmatpush1.bf16.msra.mxu0 0
    %970 = vmatprep.subr.bf16.mxu0 0
    %971 = vmatpush1.bf16.msra.mxu0 0
    %972 = vmatprep.subr.bf16.mxu0 0
    %973 = vmatpush1.bf16.msra.mxu0 0
    %974 = vmatprep.subr.bf16.mxu0 0
    %975 = vmatpush1.bf16.msra.mxu0 0
    %976 = vmatprep.subr.bf16.mxu0 0
    %977 = vmatpush1.bf16.msra.mxu0 0
    %978 = vmatprep.subr.bf16.mxu0 0
    %979 = vmatpush1.bf16.msra.mxu0 0
    %980 = vmatprep.mubr.bf16.mxu0 0
    %981 = vmatmul.mubr.bf16.gmra.mrb[0].mxu0 %v945
    %v982 = vpop.f32.mrb[0].mxu0
    %v983 = vadd.f32 %v946, %v982
    %v984 = vpop.f32.mrb[0].mxu0
    %v985 = vpop.f32.mrb[0].mxu0
    %v986 = vpop.f32.mrb[0].mxu0
    %987 = vdwg.mxu0
    %v988 = vtanh.pop %v983
    %v989 = vmax.f32 %v944, %v988
    %v990 = vpack.c.bf16 %v988, %v988
    %991 = vmatprep.subr.bf16.mxu0 0
    %992 = vmatpush1.bf16.msra.mxu0 %v660
    %993 = vmatprep.subr.bf16.mxu0 0
    %994 = vmatpush1.bf16.msra.mxu0 %v661
    %995 = vmatprep.subr.bf16.mxu0 0
    %996 = vmatpush1.bf16.msra.mxu0 %v662
    %997 = vmatprep.subr.bf16.mxu0 0
    %998 = vmatpush1.bf16.msra.mxu0 %v663
    %999 = vmatprep.subr.bf16.mxu0 0
    %1000 = vmatpush1.bf16.msra.mxu0 %v664
    %1001 = vmatprep.subr.bf16.mxu0 0
    %1002 = vmatpush1.bf16.msra.mxu0 %v665
    %1003 = vmatprep.subr.bf16.mxu0 0
    %1004 = vmatpush1.bf16.msra.mxu0 %v666
    %1005 = vmatprep.subr.bf16.mxu0 0
    %1006 = vmatpush1.bf16.msra.mxu0 %v667
    %1007 = vmatprep.subr.bf16.mxu0 0
    %1008 = vmatpush1.bf16.msra.mxu0 0
    %1009 = vmatprep.subr.bf16.mxu0 0
    %1010 = vmatpush1.bf16.msra.mxu0 0
    %1011 = vmatprep.subr.bf16.mxu0 0
    %1012 = vmatpush1.bf16.msra.mxu0 0
    %1013 = vmatprep.subr.bf16.mxu0 0
    %1014 = vmatpush1.bf16.msra.mxu0 0
    %1015 = vmatprep.subr.bf16.mxu0 0
    %1016 = vmatpush1.bf16.msra.mxu0 0
    %1017 = vmatprep.subr.bf16.mxu0 0
    %1018 = vmatpush1.bf16.msra.mxu0 0
    %1019 = vmatprep.subr.bf16.mxu0 0
    %1020 = vmatpush1.bf16.msra.mxu0 0
    %1021 = vmatprep.subr.bf16.mxu0 0
    %1022 = vmatpush1.bf16.msra.mxu0 0
    %1023 = vmatprep.mubr.bf16.mxu0 0
    %1024 = vmatmul.mubr.bf16.gmra.mrb[0].mxu0 %v990
    %v1025 = vpop.f32.mrb[0].mxu0
    %v1026 = vadd.f32 %v616, %v1025
    %v1027 = vpop.f32.mrb[0].mxu0
    %v1028 = vpop.f32.mrb[0].mxu0
    %v1029 = vpop.f32.mrb[0].mxu0
    %1030 = vdwg.mxu0
    %v1031 = vtanh.pop %v1026
    %v1032 = vmax.f32 %v989, %v1031
    %v1033 = vpack.c.bf16 %v1032, %v1032
    %v1034 = vlaneseq
    %v1035 = vshrl.u32 %v1034, 7
    %v1036 = vsub.s32 4, %v1035
    %v1037 = vrot.slane %v19, %v1036
    %v1054 = vunpack.c.l.b16 %v52
    %v1055 = vunpack.c.l.b16 %v53
    %v1056 = vunpack.c.l.b16 %v54
    %v1057 = vunpack.c.l.b16 %v55
    %v1058 = vunpack.c.l.b16 %v56
    %v1059 = vunpack.c.l.b16 %v57
    %v1060 = vunpack.c.l.b16 %v58
    %v1061 = vunpack.c.l.b16 %v59
    %v1062 = vunpack.c.l.b16 %v60
    %v1063 = vunpack.c.l.b16 %v61
    %v1064 = vunpack.c.l.b16 %v62
    %v1065 = vunpack.c.l.b16 %v63
    %v1066 = vunpack.c.l.b16 %v64
    %v1067 = vunpack.c.l.b16 %v65
    %v1068 = vunpack.c.l.b16 %v66
    %v1069 = vunpack.c.l.b16 %v67
    %v1070 = vpack.c.b16 %v1055, %v1054
    %v1071 = vpack.c.b16 %v1057, %v1056
    %v1072 = vpack.c.b16 %v1059, %v1058
    %v1073 = vpack.c.b16 %v1061, %v1060
    %v1074 = vpack.c.b16 %v1063, %v1062
    %v1075 = vpack.c.b16 %v1065, %v1064
    %v1076 = vpack.c.b16 %v1067, %v1066
    %v1077 = vpack.c.b16 %v1069, %v1068
    %1086 = vmatprep.subr.bf16.mxu0 0
    %1087 = vmatpush1.bf16.msra.mxu0 %v1070
    %1088 = vmatprep.subr.bf16.mxu0 0
    %1089 = vmatpush1.bf16.msra.mxu0 %v1071
    %1090 = vmatprep.subr.bf16.mxu0 0
    %1091 = vmatpush1.bf16.msra.mxu0 %v1072
    %1092 = vmatprep.subr.bf16.mxu0 0
    %1093 = vmatpush1.bf16.msra.mxu0 %v1073
    %1094 = vmatprep.subr.bf16.mxu0 0
    %1095 = vmatpush1.bf16.msra.mxu0 %v1074
    %1096 = vmatprep.subr.bf16.mxu0 0
    %1097 = vmatpush1.bf16.msra.mxu0 %v1075
    %1098 = vmatprep.subr.bf16.mxu0 0
    %1099 = vmatpush1.bf16.msra.mxu0 %v1076
    %1100 = vmatprep.subr.bf16.mxu0 0
    %1101 = vmatpush1.bf16.msra.mxu0 %v1077
    %1102 = vmatprep.subr.bf16.mxu0 0
    %1103 = vmatpush1.bf16.msra.mxu0 0
    %1104 = vmatprep.subr.bf16.mxu0 0
    %1105 = vmatpush1.bf16.msra.mxu0 0
    %1106 = vmatprep.subr.bf16.mxu0 0
    %1107 = vmatpush1.bf16.msra.mxu0 0
    %1108 = vmatprep.subr.bf16.mxu0 0
    %1109 = vmatpush1.bf16.msra.mxu0 0
    %1110 = vmatprep.subr.bf16.mxu0 0
    %1111 = vmatpush1.bf16.msra.mxu0 0
    %1112 = vmatprep.subr.bf16.mxu0 0
    %1113 = vmatpush1.bf16.msra.mxu0 0
    %1114 = vmatprep.subr.bf16.mxu0 0
    %1115 = vmatpush1.bf16.msra.mxu0 0
    %1116 = vmatprep.subr.bf16.mxu0 0
    %1117 = vmatpush1.bf16.msra.mxu0 0
    %1118 = vmatprep.mubr.bf16.mxu0 0
    %1119 = vmatmul.mubr.bf16.gmra.mrb[0].mxu0 %v1033
    %v1120 = vpop.f32.mrb[0].mxu0
    %v1121 = vadd.f32 %v1037, %v1120
    %v1122 = vpop.f32.mrb[0].mxu0
    %v1123 = vpop.f32.mrb[0].mxu0
    %v1124 = vpop.f32.mrb[0].mxu0
    %1125 = vdwg.mxu0
    %1126 = vst [vmem:[#allocation2] sm:$0x3] %v1121
    // Predicated region
    $region18: #{audio_rnn_forward.1} parent=1 // pred_check
      _
    $region19: #{audio_rnn_forward.1} parent=1 // pred_check_branch
      %1128 = sbr.rel (0) target = $region21
    $region20: #{audio_rnn_forward.1} parent=1 // pred_region
      %s1130 = ssub.s32 32, 32
      %1131 = vsyncadd [#allocation3], %s1130
      %s1133 = sshll.u32 [#allocation2], 4
      %s1134 = int_to_ptr.vmem [resolvable:$true] %s1133
      %1136 = dma.vmem_to_hbm [thread:$0]  %s1134, 32, %s4, [#allocation3]
    $region21: #{audio_rnn_forward.1} parent=1 // pred_fallthru
      _
    // Predicated region
    $region22: #{audio_rnn_forward.1} parent=1 // pred_check
      _
    $region23: #{audio_rnn_forward.1} parent=1 // pred_check_branch
      %1138 = sbr.rel (0) target = $region25
    $region24: #{audio_rnn_forward.1} parent=1 // pred_region
      %1139 = dma.done [#allocation3], 32
    $region25: #{audio_rnn_forward.1} parent=1 // pred_fallthru
      _
    %1140 = vsyncpa [#allocation3], 1

</llo_original>
